<compile_context>
chip_gen: v5e
topology: v5e:2x2
jax: 0.10.0
libtpu: 0.0.40
codegen_flags: <defaults>
</compile_context>

<pallas_src>
import functools

import jax
import jax.numpy as jnp
from jax.experimental import pallas as pl
from jax.experimental.pallas import tpu as pltpu

# Accurate f32 matmuls for both the Pallas kernel and the XLA reference so the
# correctness check is not dominated by single-pass bf16 MXU rounding.
jax.config.update("jax_default_matmul_precision", "highest")


def _round_up(x, m):
    return (x + m - 1) // m * m


def _layout(dep_in_dim, berth_feat_dim, hidden_dim):
    """Row/lane layout of the packed parameter slab (all row offsets 8-aligned)."""
    Dp = _round_up(dep_in_dim, 8)
    Fp = _round_up(berth_feat_dim, 8)
    Hp = _round_up(hidden_dim, 8)
    W = max(128, 2 * Hp)                       # slab lane width
    offs, off = {}, 0
    for name, nrows in (
            ("dep_fused", Dp),    # [w1 | wc1_dep]                 (D, 2*Hp)
            ("w2", Hp),           # w2                             (H, H)
            ("berth_fused", Fp),  # [wb1 | wc1_agg]                (F, 2*Hp)
            ("headsT", 8),        # rows: wb2^T, wm^T, ws^T, wc2^T (4, H)
            ("hbias", 8),         # rows: bb2, bm, bs, bc2 broadcast to 128 lanes
            ("vbias", 8)):        # rows: [b1 | bc1], b2, [bb1 | 0]
        offs[name] = off
        off += nrows
    return offs, off, Dp, Fp, Hp, W


def pack_params(p, dep_in_dim, berth_feat_dim, hidden_dim):
    """Pack all weights/biases into a single zero-padded (R, W) f32 slab."""
    D, F, H = dep_in_dim, berth_feat_dim, hidden_dim
    offs, R, _, _, Hp, W = _layout(D, F, H)
    ones128 = jnp.ones((128,), jnp.float32)
    s = jnp.zeros((R, W), jnp.float32)
    o = offs["dep_fused"]
    s = s.at[o:o + D, 0:H].set(p["w1"])
    s = s.at[o:o + D, Hp:Hp + H].set(p["wc1"][:D])
    o = offs["w2"]
    s = s.at[o:o + H, 0:H].set(p["w2"])
    o = offs["berth_fused"]
    s = s.at[o:o + F, 0:H].set(p["wb1"])
    s = s.at[o:o + F, Hp:Hp + H].set(p["wc1"][D:])
    o = offs["headsT"]
    s = s.at[o + 0, 0:H].set(p["wb2"][:, 0])
    s = s.at[o + 1, 0:H].set(p["wm"][:, 0])
    s = s.at[o + 2, 0:H].set(p["ws"][:, 0])
    s = s.at[o + 3, 0:H].set(p["wc2"][:, 0])
    o = offs["hbias"]
    s = s.at[o + 0, 0:128].set(ones128 * p["bb2"][0, 0])
    s = s.at[o + 1, 0:128].set(ones128 * p["bm"][0, 0])
    s = s.at[o + 2, 0:128].set(ones128 * p["bs"][0, 0])
    s = s.at[o + 3, 0:128].set(ones128 * p["bc2"][0, 0])
    o = offs["vbias"]
    s = s.at[o + 0, 0:H].set(p["b1"][0])
    s = s.at[o + 0, Hp:Hp + H].set(p["bc1"][0])
    s = s.at[o + 1, 0:H].set(p["b2"][0])
    s = s.at[o + 2, 0:H].set(p["bb1"][0])
    return s


def actor_critic_kernel(dep_ref, berth_ref, p_ref, out_ref, *, NB, D, F, Hp, offs):
    f32 = jnp.float32
    relu = lambda x: jnp.maximum(x, 0.0)
    dot = lambda a, b: jnp.dot(a, b, preferred_element_type=f32)
    H2 = 2 * Hp
    od, ow2, ob, oh, ohb, ovb = (offs[k] for k in (
        "dep_fused", "w2", "berth_fused", "headsT", "hbias", "vbias"))

    dep = dep_ref[...]                                     # (1, D)
    berth = berth_ref[...]                                 # (NB, F)

    # --- dep branch: fused [w1 | wc1_dep], fused bias row [b1 | bc1] --------
    dep_y = dot(dep, p_ref[od:od + D, 0:H2]) + p_ref[ovb:ovb + 1, 0:H2]
    h1 = relu(dep_y[:, 0:Hp])                              # (1, Hp)
    dep_c = dep_y[:, Hp:H2]                                # dep @ wc1_dep + bc1
    h = relu(dot(h1, p_ref[ow2:ow2 + Hp, 0:Hp])
             + p_ref[ovb + 1:ovb + 2, 0:Hp])               # (1, Hp)

    # --- berth branch: fused [wb1 | wc1_agg], bias row [bb1 | 0] ------------
    berth_y = dot(berth, p_ref[ob:ob + F, 0:H2]) + p_ref[ovb + 2:ovb + 3, 0:H2]
    hb = relu(berth_y[:, 0:Hp])                            # (NB, Hp)
    # mean(berth, 0) @ wc1_agg == row-mean of (berth @ wc1_agg)  (linearity)
    aggc = jnp.sum(berth_y[:, Hp:H2], axis=0, keepdims=True) * (1.0 / NB)
    hc = relu(dep_c + aggc)                                # (1, Hp)

    # --- all four heads in ONE matmul against the transposed head weights ---
    # Stack [hb ; h ; hc ; zeros] to 128 rows so the matmul result is exactly
    # the (8, 128) output tile (row 0 = logits lanes, rows 1-3 = scalars).
    stacked = jnp.concatenate(
        [hb, h, hc, jnp.zeros((128 - NB - 2, Hp), f32)], axis=0)   # (128, Hp)
    yt = jax.lax.dot_general(
        p_ref[oh:oh + 8, 0:Hp], stacked,
        dimension_numbers=(((1,), (1,)), ((), ())),
        preferred_element_type=f32)                        # (8, 128)
    y = yt + p_ref[ohb:ohb + 8, 0:128]                     # per-row head biases

    # Row 0: logits (lanes 0..NB-1).  Row 1: mean (lane NB).  Row 2: scale
    # (lane NB).  Row 3: value (lane NB+1).  Single unmasked full-width store.
    row = jax.lax.broadcasted_iota(jnp.int32, (8, 128), 0)
    mean_t = jnp.clip(y, -1000.0, 1000.0)
    std_t = jnp.clip(jnp.exp(jnp.clip(y, -10.0, 2.0)), 0.001, 1.0) + 1e-6
    out_ref[...] = jnp.where(row == 1, mean_t, jnp.where(row == 2, std_t, y))


@functools.partial(jax.jit, static_argnames=("hidden_dim",))
def actor_critic_forward_batched(dep_feats, berth_feats, packed_params, *, hidden_dim):
    """Batched forward.  dep_feats: (B, D), berth_feats: (B, NB, F), NB > 0.

    Returns (mean (B,), scale (B,), logits (B, NB), value (B,)).
    """
    # TODO(synk): the berth_feats.size(0) == 0 branch of the PyTorch model needs
    # dynamic (zero) shapes and is not expressible here; only NB > 0 is handled.
    B, D = dep_feats.shape
    Bb, NB, F = berth_feats.shape
    assert Bb == B and 1 <= NB <= 126
    offs, R, _, _, Hp, W = _layout(D, F, hidden_dim)
    assert packed_params.shape == (R, W)

    dep3 = dep_feats.astype(jnp.float32).reshape(B, 1, D)
    berth3 = berth_feats.astype(jnp.float32)

    kernel = functools.partial(actor_critic_kernel, NB=NB, D=D, F=F, Hp=Hp, offs=offs)
    flops = 2 * B * (D * 2 * Hp + Hp * Hp + NB * F * 2 * Hp + 8 * Hp * 128)
    bytes_accessed = 4 * (R * W + B * (D + NB * F + 8 * 128))

    out = pl.pallas_call(
        kernel,
        grid=(B,),
        in_specs=[
            pl.BlockSpec((None, 1, D), lambda b: (b, 0, 0)),
            pl.BlockSpec((None, NB, F), lambda b: (b, 0, 0)),
            # Constant index_map -> parameter slab DMA'd once, VMEM-resident
            # across all grid steps.
            pl.BlockSpec((R, W), lambda b: (0, 0)),
        ],
        out_specs=pl.BlockSpec((None, 8, 128), lambda b: (b, 0, 0)),
        out_shape=jax.ShapeDtypeStruct((B, 8, 128), jnp.float32),
        compiler_params=pltpu.CompilerParams(dimension_semantics=("parallel",)),
        cost_estimate=pl.CostEstimate(flops=flops, transcendentals=B * 8 * 128,
                                      bytes_accessed=bytes_accessed),
    )(dep3, berth3, packed_params)

    mean = out[:, 1, NB]
    scale = out[:, 2, NB]
    value = out[:, 3, NB + 1]
    logits = out[:, 0, :NB]
    return mean, scale, logits, value


@functools.partial(jax.jit, static_argnames=("hidden_dim",))
def actor_critic_forward(dep_feats, berth_feats, packed_params, *, hidden_dim):
    """Single-observation forward matching ActorCritic.forward (NB > 0)."""
    mean, scale, logits, value = actor_critic_forward_batched(
        dep_feats[None], berth_feats[None], packed_params, hidden_dim=hidden_dim)
    return mean[0], scale[0], logits[0], value[0]


def init_params(key, dep_in_dim, berth_feat_dim, hidden_dim):
    """PyTorch-style Linear init (U(-1/sqrt(fan_in), 1/sqrt(fan_in)))."""
    def linear(k, fan_in, fan_out):
        kw, kb = jax.random.split(k)
        bound = 1.0 / jnp.sqrt(float(fan_in))
        w = jax.random.uniform(kw, (fan_in, fan_out), jnp.float32, -bound, bound)
        b = jax.random.uniform(kb, (1, fan_out), jnp.float32, -bound, bound)
        return w, b

    keys = jax.random.split(key, 8)
    p = {}
    p["w1"], p["b1"] = linear(keys[0], dep_in_dim, hidden_dim)
    p["w2"], p["b2"] = linear(keys[1], hidden_dim, hidden_dim)
    p["wm"], p["bm"] = linear(keys[2], hidden_dim, 1)
    p["ws"], p["bs"] = linear(keys[3], hidden_dim, 1)
    p["bs"] = jnp.full((1, 1), -3.0, jnp.float32)   # nn.init.constant_(dep_log_std.bias, -3.0)
    p["wb1"], p["bb1"] = linear(keys[4], berth_feat_dim, hidden_dim)
    p["wb2"], p["bb2"] = linear(keys[5], hidden_dim, 1)
    p["wc1"], p["bc1"] = linear(keys[6], dep_in_dim + berth_feat_dim, hidden_dim)
    p["wc2"], p["bc2"] = linear(keys[7], hidden_dim, 1)
    return p


def reference_forward(dep_feats, berth_feats, p):
    """Pure-JAX reference mirroring the PyTorch forward (for validation)."""
    relu = lambda x: jnp.maximum(x, 0.0)
    h = relu(dep_feats @ p["w1"] + p["b1"][0])
    h = relu(h @ p["w2"] + p["b2"][0])
    mean = jnp.clip((h @ p["wm"] + p["bm"][0])[0], -1000.0, 1000.0)
    log_std = jnp.clip((h @ p["ws"] + p["bs"][0])[0], -10.0, 2.0)
    scale = jnp.clip(jnp.exp(log_std), 0.001, 1.0) + 1e-6
    hb = relu(berth_feats @ p["wb1"] + p["bb1"][0])
    logits = (hb @ p["wb2"] + p["bb2"][0])[:, 0]
    agg = berth_feats.mean(0)
    cin = jnp.concatenate([dep_feats, agg], -1)
    hc = relu(cin @ p["wc1"] + p["bc1"][0])
    value = (hc @ p["wc2"] + p["bc2"][0])[0]
    return mean, scale, logits, value


if __name__ == "__main__":
    dep_in_dim, berth_feat_dim, hidden_dim, num_berths, batch = 8, 16, 32, 8, 4

    key = jax.random.PRNGKey(0)
    k_par, k_dep, k_berth = jax.random.split(key, 3)
    params = init_params(k_par, dep_in_dim, berth_feat_dim, hidden_dim)
    packed = pack_params(params, dep_in_dim, berth_feat_dim, hidden_dim)

    dep_b = jax.random.normal(k_dep, (batch, dep_in_dim), jnp.float32)
    berth_b = jax.random.normal(k_berth, (batch, num_berths, berth_feat_dim), jnp.float32)

    # Single-observation forward (matches the PyTorch module interface).
    mean, scale, logits, value = actor_critic_forward(
        dep_b[0], berth_b[0], packed, hidden_dim=hidden_dim)
    jax.block_until_ready((mean, scale, logits, value))

    r_mean, r_scale, r_logits, r_value = reference_forward(dep_b[0], berth_b[0], params)
    assert jnp.allclose(mean, r_mean, rtol=1e-3, atol=1e-3), (mean, r_mean)
    assert jnp.allclose(scale, r_scale, rtol=1e-3, atol=1e-3), (scale, r_scale)
    assert jnp.allclose(logits, r_logits, rtol=1e-3, atol=1e-3)
    assert jnp.allclose(value, r_value, rtol=1e-3, atol=1e-3), (value, r_value)

    # Batched forward: one pallas_call, grid=(B,), parameters VMEM-resident.
    bm, bs, bl, bv = actor_critic_forward_batched(
        dep_b, berth_b, packed, hidden_dim=hidden_dim)
    jax.block_until_ready((bm, bs, bl, bv))
    for i in range(batch):
        rm, rs, rl, rv = reference_forward(dep_b[i], berth_b[i], params)
        assert jnp.allclose(bm[i], rm, rtol=1e-3, atol=1e-3), (i, bm[i], rm)
        assert jnp.allclose(bs[i], rs, rtol=1e-3, atol=1e-3), (i, bs[i], rs)
        assert jnp.allclose(bl[i], rl, rtol=1e-3, atol=1e-3), i
        assert jnp.allclose(bv[i], rv, rtol=1e-3, atol=1e-3), (i, bv[i], rv)

    print("KERNEL_OK")
</pallas_src>

<mosaic_0001>
module attributes {stable_mosaic.version = 11 : i64} {
  func.func @actor_critic_kernel(%arg0: i32, %arg1: memref<1x1x8xf32, #tpu.memory_space<vmem>>, %arg2: memref<1x8x16xf32, #tpu.memory_space<vmem>>, %arg3: memref<80x128xf32, #tpu.memory_space<vmem>>, %arg4: memref<1x8x128xf32, #tpu.memory_space<vmem>>) attributes {dimension_semantics = [#tpu.dimension_semantics<parallel>], iteration_bounds = array<i64: 1>, scalar_prefetch = 0 : i64, scratch_operands = 0 : i64, tpu.core_type = #tpu.core_type<tc>, window_params = [{transform_indices = @transform_0, window_bounds = array<i64: 1, 1, 8>}, {transform_indices = @transform_1, window_bounds = array<i64: 1, 8, 16>}, {pipeline_mode = #tpu.pipeline_mode<synchronous>, transform_indices = @transform_2, window_bounds = array<i64: 80, 128>}, {transform_indices = @transform_3, window_bounds = array<i64: 1, 8, 128>}]} {
    %c0 = arith.constant 0 : index
    %c0_0 = arith.constant 0 : index
    %c0_1 = arith.constant 0 : index
    %0 = vector.load %arg1[%c0, %c0_0, %c0_1] : memref<1x1x8xf32, #tpu.memory_space<vmem>>, vector<1x1x8xf32>
    %1 = vector.shape_cast %0 : vector<1x1x8xf32> to vector<1x8xf32>
    %c0_2 = arith.constant 0 : index
    %c0_3 = arith.constant 0 : index
    %c0_4 = arith.constant 0 : index
    %2 = vector.load %arg2[%c0_2, %c0_3, %c0_4] : memref<1x8x16xf32, #tpu.memory_space<vmem>>, vector<1x8x16xf32>
    %3 = vector.shape_cast %2 : vector<1x8x16xf32> to vector<8x16xf32>
    %c0_5 = arith.constant 0 : index
    %c0_6 = arith.constant 0 : index
    %4 = vector.load %arg3[%c0_5, %c0_6] : memref<80x128xf32, #tpu.memory_space<vmem>>, vector<8x64xf32>
    %cst = arith.constant dense<0.000000e+00> : vector<1x64xf32>
    %5 = tpu.matmul %1, %4, %cst {dimension_numbers = #tpu.dot_dimension_numbers<[1], [0], [0], [1], [0, 0, 1, 1], [], []>, precision = #tpu.contract_precision<fp32>} : vector<1x8xf32>, vector<8x64xf32>, vector<1x64xf32> -> vector<1x64xf32>
    %c72 = arith.constant 72 : index
    %c0_7 = arith.constant 0 : index
    %6 = vector.load %arg3[%c72, %c0_7] : memref<80x128xf32, #tpu.memory_space<vmem>>, vector<1x64xf32>
    %7 = arith.addf %5, %6 : vector<1x64xf32>
    %8 = vector.extract_strided_slice %7 {offsets = [0, 0], sizes = [1, 32], strides = [1, 1]} : vector<1x64xf32> to vector<1x32xf32>
    %cst_8 = arith.constant 0.000000e+00 : f32
    %9 = vector.broadcast %cst_8 : f32 to vector<1x32xf32>
    %10 = arith.maximumf %8, %9 : vector<1x32xf32>
    %11 = vector.extract_strided_slice %7 {offsets = [0, 32], sizes = [1, 32], strides = [1, 1]} : vector<1x64xf32> to vector<1x32xf32>
    %c8 = arith.constant 8 : index
    %c0_9 = arith.constant 0 : index
    %12 = vector.load %arg3[%c8, %c0_9] : memref<80x128xf32, #tpu.memory_space<vmem>>, vector<32x32xf32>
    %cst_10 = arith.constant dense<0.000000e+00> : vector<1x32xf32>
    %13 = tpu.matmul %10, %12, %cst_10 {dimension_numbers = #tpu.dot_dimension_numbers<[1], [0], [0], [1], [0, 0, 1, 1], [], []>, precision = #tpu.contract_precision<fp32>} : vector<1x32xf32>, vector<32x32xf32>, vector<1x32xf32> -> vector<1x32xf32>
    %c73 = arith.constant 73 : index
    %c0_11 = arith.constant 0 : index
    %14 = vector.load %arg3[%c73, %c0_11] : memref<80x128xf32, #tpu.memory_space<vmem>>, vector<1x32xf32>
    %15 = arith.addf %13, %14 : vector<1x32xf32>
    %cst_12 = arith.constant 0.000000e+00 : f32
    %16 = vector.broadcast %cst_12 : f32 to vector<1x32xf32>
    %17 = arith.maximumf %15, %16 : vector<1x32xf32>
    %c40 = arith.constant 40 : index
    %c0_13 = arith.constant 0 : index
    %18 = vector.load %arg3[%c40, %c0_13] : memref<80x128xf32, #tpu.memory_space<vmem>>, vector<16x64xf32>
    %cst_14 = arith.constant dense<0.000000e+00> : vector<8x64xf32>
    %19 = tpu.matmul %3, %18, %cst_14 {dimension_numbers = #tpu.dot_dimension_numbers<[1], [0], [0], [1], [0, 0, 1, 1], [], []>, precision = #tpu.contract_precision<fp32>} : vector<8x16xf32>, vector<16x64xf32>, vector<8x64xf32> -> vector<8x64xf32>
    %c74 = arith.constant 74 : index
    %c0_15 = arith.constant 0 : index
    %20 = vector.load %arg3[%c74, %c0_15] : memref<80x128xf32, #tpu.memory_space<vmem>>, vector<1x64xf32>
    %21 = vector.broadcast %20 : vector<1x64xf32> to vector<8x64xf32>
    %22 = arith.addf %19, %21 : vector<8x64xf32>
    %23 = vector.extract_strided_slice %22 {offsets = [0, 0], sizes = [8, 32], strides = [1, 1]} : vector<8x64xf32> to vector<8x32xf32>
    %cst_16 = arith.constant 0.000000e+00 : f32
    %24 = vector.broadcast %cst_16 : f32 to vector<8x32xf32>
    %25 = arith.maximumf %23, %24 : vector<8x32xf32>
    %26 = vector.extract_strided_slice %22 {offsets = [0, 32], sizes = [8, 32], strides = [1, 1]} : vector<8x64xf32> to vector<8x32xf32>
    %cst_17 = arith.constant dense<0.000000e+00> : vector<32xf32>
    %27 = vector.multi_reduction <add>, %26, %cst_17 [0] : vector<8x32xf32> to vector<32xf32>
    %28 = vector.shape_cast %27 : vector<32xf32> to vector<1x32xf32>
    %cst_18 = arith.constant 1.250000e-01 : f32
    %29 = vector.broadcast %cst_18 : f32 to vector<1x32xf32>
    %30 = arith.mulf %28, %29 : vector<1x32xf32>
    %31 = arith.addf %11, %30 : vector<1x32xf32>
    %cst_19 = arith.constant 0.000000e+00 : f32
    %32 = vector.broadcast %cst_19 : f32 to vector<1x32xf32>
    %33 = arith.maximumf %31, %32 : vector<1x32xf32>
    %cst_20 = arith.constant 0.000000e+00 : f32
    %34 = vector.broadcast %cst_20 : f32 to vector<118x32xf32>
    %35 = tpu.concatenate %25, %17, %33, %34 in 0 : vector<8x32xf32>, vector<1x32xf32>, vector<1x32xf32>, vector<118x32xf32> -> vector<128x32xf32>
    %c56 = arith.constant 56 : index
    %c0_21 = arith.constant 0 : index
    %36 = vector.load %arg3[%c56, %c0_21] : memref<80x128xf32, #tpu.memory_space<vmem>>, vector<8x32xf32>
    %cst_22 = arith.constant dense<0.000000e+00> : vector<8x128xf32>
    %37 = tpu.matmul %36, %35, %cst_22 {dimension_numbers = #tpu.dot_dimension_numbers<[1], [1], [0], [0], [0, 0, 1, 0], [], []>, precision = #tpu.contract_precision<fp32>} : vector<8x32xf32>, vector<128x32xf32>, vector<8x128xf32> -> vector<8x128xf32>
    %c64 = arith.constant 64 : index
    %c0_23 = arith.constant 0 : index
    %38 = vector.load %arg3[%c64, %c0_23] : memref<80x128xf32, #tpu.memory_space<vmem>>, vector<8x128xf32>
    %39 = arith.addf %37, %38 : vector<8x128xf32>
    %40 = tpu.iota {dimensions = array<i32: 0>} : vector<8x128xi32>
    %cst_24 = arith.constant -1.000000e+03 : f32
    %cst_25 = arith.constant 1.000000e+03 : f32
    %41 = vector.broadcast %cst_24 : f32 to vector<8x128xf32>
    %42 = arith.maximumf %41, %39 : vector<8x128xf32>
    %43 = vector.broadcast %cst_25 : f32 to vector<8x128xf32>
    %44 = arith.minimumf %43, %42 : vector<8x128xf32>
    %cst_26 = arith.constant -1.000000e+01 : f32
    %cst_27 = arith.constant 2.000000e+00 : f32
    %45 = vector.broadcast %cst_26 : f32 to vector<8x128xf32>
    %46 = arith.maximumf %45, %39 : vector<8x128xf32>
    %47 = vector.broadcast %cst_27 : f32 to vector<8x128xf32>
    %48 = arith.minimumf %47, %46 : vector<8x128xf32>
    %49 = math.exp %48 : vector<8x128xf32>
    %cst_28 = arith.constant 1.000000e-03 : f32
    %cst_29 = arith.constant 1.000000e+00 : f32
    %50 = vector.broadcast %cst_28 : f32 to vector<8x128xf32>
    %51 = arith.maximumf %50, %49 : vector<8x128xf32>
    %52 = vector.broadcast %cst_29 : f32 to vector<8x128xf32>
    %53 = arith.minimumf %52, %51 : vector<8x128xf32>
    %cst_30 = arith.constant 9.99999997E-7 : f32
    %54 = vector.broadcast %cst_30 : f32 to vector<8x128xf32>
    %55 = arith.addf %53, %54 : vector<8x128xf32>
    %c1_i32 = arith.constant 1 : i32
    %56 = vector.broadcast %c1_i32 : i32 to vector<8x128xi32>
    %57 = arith.cmpi eq, %40, %56 : vector<8x128xi32>
    %c2_i32 = arith.constant 2 : i32
    %58 = vector.broadcast %c2_i32 : i32 to vector<8x128xi32>
    %59 = arith.cmpi eq, %40, %58 : vector<8x128xi32>
    %60 = arith.select %59, %55, %39 : vector<8x128xi1>, vector<8x128xf32>
    %61 = arith.select %57, %44, %60 : vector<8x128xi1>, vector<8x128xf32>
    %c0_31 = arith.constant 0 : index
    %c0_32 = arith.constant 0 : index
    %c0_33 = arith.constant 0 : index
    %62 = vector.load %arg4[%c0_31, %c0_32, %c0_33] : memref<1x8x128xf32, #tpu.memory_space<vmem>>, vector<1x8x128xf32>
    %63 = vector.shape_cast %62 : vector<1x8x128xf32> to vector<8x128xf32>
    %64 = vector.shape_cast %61 : vector<8x128xf32> to vector<1x8x128xf32>
    tpu.vector_store %arg4[%c0_31, %c0_32, %c0_33], %64 {strides = array<i32>} : memref<1x8x128xf32, #tpu.memory_space<vmem>>, vector<1x8x128xf32>,
    return
  }
  func.func @transform_0(%arg0: i32) -> (i32, i32, i32) {
    %c0_i32 = arith.constant 0 : i32
    %c0_i32_0 = arith.constant 0 : i32
    %c0_i32_1 = arith.constant 0 : i32
    return %arg0, %c0_i32, %c0_i32_0 : i32, i32, i32
  }
  func.func @transform_1(%arg0: i32) -> (i32, i32, i32) {
    %c0_i32 = arith.constant 0 : i32
    %c0_i32_0 = arith.constant 0 : i32
    %c0_i32_1 = arith.constant 0 : i32
    return %arg0, %c0_i32, %c0_i32_0 : i32, i32, i32
  }
  func.func @transform_2(%arg0: i32) -> (i32, i32) {
    %c0_i32 = arith.constant 0 : i32
    %c0_i32_0 = arith.constant 0 : i32
    %c0_i32_1 = arith.constant 0 : i32
    return %c0_i32, %c0_i32_0 : i32, i32
  }
  func.func @transform_3(%arg0: i32) -> (i32, i32, i32) {
    %c0_i32 = arith.constant 0 : i32
    %c0_i32_0 = arith.constant 0 : i32
    %c0_i32_1 = arith.constant 0 : i32
    return %arg0, %c0_i32, %c0_i32_0 : i32, i32, i32
  }
}

</mosaic_0001>

<llo_original>
// kernel: actor_critic_forward_batched.1
$region0: #{actor_critic_forward_batched.1}
  #allocation0 [shape = 'u32[]', space=smem, size = 0x4, offset = 0x4, fixed_abs, tag = 'smem constant byte address 0x4 - core index']
  #allocation1 [shape = 'u32[72,128]{1,0:T(1,128)}', space=vmem, size = 0x9000, scoped, tag = 'internal scratch']
  %s0 = inlined_call_operand.vmem [shape: f32[1,1,8], index: 0, kind: input, shape index: {}]
  %s1 = inlined_call_operand.hbm [shape: f32[1,8,16], index: 1, kind: input, shape index: {}]
  %s2 = inlined_call_operand.hbm [shape: f32[80,128], index: 2, kind: input, shape index: {}]
  %s3 = inlined_call_operand.vmem [shape: f32[1,8,128], index: 3, kind: output, shape index: {}]
  %s4 = sld [smem:[#allocation0]]
  $region30: #{actor_critic_forward_batched.1} parent=0
    _
  %s6 = ssub.s32 1, %s4
  %s7 = scalar_select 0, %s6, %s4
  $region1: #{actor_critic_forward_batched.1} parent=0
    #allocation2 [shape = 'u8[4096]{0}', space=vmem, size = 0x1000, scoped, tag = 'input window, operand 1, single buffered']
    #allocation3 [shape = 's32[1]{0}', space=sflag, size = 0x4, scoped, tag = 'scoped memory for actor_critic_forward_batched.1']
    #allocation4 [shape = 'u8[40960]{0}', space=vmem, size = 0xa000, scoped, tag = 'input window, operand 2, single buffered']
    #allocation5 [shape = 's32[1]{0}', space=sflag, size = 0x4, scoped, tag = 'scoped memory for actor_critic_forward_batched.1']
    %8 = vsyncpa [#allocation3], 0
    %9 = vsyncpa [#allocation5], 0
    // Predicated region
    $region2: #{actor_critic_forward_batched.1} parent=1 // pred_check
      _
    $region3: #{actor_critic_forward_batched.1} parent=1 // pred_check_branch
      %11 = sbr.rel (0) target = $region5
    $region4: #{actor_critic_forward_batched.1} parent=1 // pred_region
      _
    $region5: #{actor_critic_forward_batched.1} parent=1 // pred_fallthru
      _
    // Predicated region
    $region6: #{actor_critic_forward_batched.1} parent=1 // pred_check
      _
    $region7: #{actor_critic_forward_batched.1} parent=1 // pred_check_branch
      %13 = sbr.rel (0) target = $region9
    $region8: #{actor_critic_forward_batched.1} parent=1 // pred_region
      %15 = vsyncadd [#allocation3], 0
      %s17 = sshll.u32 %s1, 4
      %s18 = int_to_ptr.hbm [resolvable:$true] %s17
      %s19 = sshll.u32 [#allocation2], 4
      %s20 = int_to_ptr.vmem [resolvable:$true] %s19
      %22 = dma.hbm_to_vmem [thread:$0]  %s18, 128, %s20, [#allocation3]
    $region9: #{actor_critic_forward_batched.1} parent=1 // pred_fallthru
      _
    // Predicated region
    $region10: #{actor_critic_forward_batched.1} parent=1 // pred_check
      _
    $region11: #{actor_critic_forward_batched.1} parent=1 // pred_check_branch
      %24 = sbr.rel (0) target = $region13
    $region12: #{actor_critic_forward_batched.1} parent=1 // pred_region
      %26 = vsyncadd [#allocation5], 0
      %s27 = sshll.u32 %s2, 4
      %s28 = int_to_ptr.hbm [resolvable:$true] %s27
      %s29 = sshll.u32 [#allocation4], 4
      %s30 = int_to_ptr.vmem [resolvable:$true] %s29
      %35 = dma.hbm_to_vmem [thread:$0]  %s28, 1280, %s30, [#allocation5], 128, 128, 8
    $region13: #{actor_critic_forward_batched.1} parent=1 // pred_fallthru
      _
    // Predicated region
    $region14: #{actor_critic_forward_batched.1} parent=1 // pred_check
      _
    $region15: #{actor_critic_forward_batched.1} parent=1 // pred_check_branch
      %37 = sbr.rel (0) target = $region17
    $region16: #{actor_critic_forward_batched.1} parent=1 // pred_region
      %39 = dma.done [#allocation3], 128
    $region17: #{actor_critic_forward_batched.1} parent=1 // pred_fallthru
      _
    // Predicated region
    $region18: #{actor_critic_forward_batched.1} parent=1 // pred_check
      _
    $region19: #{actor_critic_forward_batched.1} parent=1 // pred_check_branch
      %41 = sbr.rel (0) target = $region21
    $region20: #{actor_critic_forward_batched.1} parent=1 // pred_region
      %43 = dma.done [#allocation5], 1280
    $region21: #{actor_critic_forward_batched.1} parent=1 // pred_fallthru
      _
    %v44 = vld [vmem:[%s0] sm:$0x1]
    %v45 = vld [vmem:[#allocation2] sm:$0xff]
    %v46 = vld [vmem:[#allocation4] sm:$0xff]
    %v47 = vld [vmem:[#allocation4 + $0x48] sm:$0x1]
    %vm48 = vcmask 64512
    %v50 = vsel %vm48, %v44, 0
    %52 = vmatpush.msra.mxu0 0.0
    %53 = vmatpush.msra.mxu0 0.0
    %54 = vmatpush.msra.mxu0 0.0
    %55 = vmatpush.msra.mxu0 0.0
    %56 = vmatpush.msra.mxu0 0.0
    %57 = vmatpush.msra.mxu0 0.0
    %58 = vmatpush.msra.mxu0 0.0
    %59 = vmatpush.msra.mxu0 0.0
    %60 = vmatpush.msra.mxu0 0.0
    %61 = vmatpush.msra.mxu0 0.0
    %62 = vmatpush.msra.mxu0 0.0
    %63 = vmatpush.msra.mxu0 0.0
    %64 = vmatpush.msra.mxu0 0.0
    %65 = vmatpush.msra.mxu0 0.0
    %66 = vmatpush.msra.mxu0 0.0
    %v67 = vand.u32 %v46, 4294901760
    %68 = vmatpush.msra.mxu0 %v67
    %v69 = vand.u32 %v50, 4294901760
    %v70 = vsub.f32 %v50, %v69
    %v71 = vand.u32 %v70, 4294901760
    %v72 = vsub.f32 %v70, %v71
    %v73 = vand.u32 %v72, 4294901760
    %74 = vmatmul.f32.gmra.mxu0 %v73
    %v75 = vpop.f32.mrf.mxu0
    %v76 = vadd.f32 %v47, %v75
    %77 = vdwg.mxu0
    %78 = vmatpush.msra.mxu0 0.0
    %79 = vmatpush.msra.mxu0 0.0
    %80 = vmatpush.msra.mxu0 0.0
    %81 = vmatpush.msra.mxu0 0.0
    %82 = vmatpush.msra.mxu0 0.0
    %83 = vmatpush.msra.mxu0 0.0
    %84 = vmatpush.msra.mxu0 0.0
    %85 = vmatpush.msra.mxu0 0.0
    %86 = vmatpush.msra.mxu0 0.0
    %87 = vmatpush.msra.mxu0 0.0
    %88 = vmatpush.msra.mxu0 0.0
    %89 = vmatpush.msra.mxu0 0.0
    %90 = vmatpush.msra.mxu0 0.0
    %91 = vmatpush.msra.mxu0 0.0
    %92 = vmatpush.msra.mxu0 0.0
    %v93 = vand.u32 %v46, 4294901760
    %v94 = vsub.f32 %v46, %v93
    %v95 = vand.u32 %v94, 4294901760
    %v96 = vsub.f32 %v94, %v95
    %v97 = vand.u32 %v96, 4294901760
    %98 = vmatpush.msra.mxu0 %v97
    %v99 = vand.u32 %v50, 4294901760
    %100 = vmatmul.f32.gmra.mxu0 %v99
    %v101 = vpop.f32.mrf.mxu0
    %v102 = vadd.f32 %v76, %v101
    %103 = vdwg.mxu0
    %104 = vmatpush.msra.mxu0 0.0
    %105 = vmatpush.msra.mxu0 0.0
    %106 = vmatpush.msra.mxu0 0.0
    %107 = vmatpush.msra.mxu0 0.0
    %108 = vmatpush.msra.mxu0 0.0
    %109 = vmatpush.msra.mxu0 0.0
    %110 = vmatpush.msra.mxu0 0.0
    %111 = vmatpush.msra.mxu0 0.0
    %112 = vmatpush.msra.mxu0 0.0
    %113 = vmatpush.msra.mxu0 0.0
    %114 = vmatpush.msra.mxu0 0.0
    %115 = vmatpush.msra.mxu0 0.0
    %116 = vmatpush.msra.mxu0 0.0
    %117 = vmatpush.msra.mxu0 0.0
    %118 = vmatpush.msra.mxu0 0.0
    %v119 = vand.u32 %v46, 4294901760
    %v120 = vsub.f32 %v46, %v119
    %121 = vmatpush.msra.mxu0 %v120
    %v122 = vand.u32 %v50, 4294901760
    %v123 = vsub.f32 %v50, %v122
    %124 = vmatmul.f32.gmra.mxu0 %v123
    %v125 = vpop.f32.mrf.mxu0
    %v126 = vadd.f32 %v102, %v125
    %127 = vdwg.mxu0
    %128 = vmatpush.msra.mxu0 0.0
    %129 = vmatpush.msra.mxu0 0.0
    %130 = vmatpush.msra.mxu0 0.0
    %131 = vmatpush.msra.mxu0 0.0
    %132 = vmatpush.msra.mxu0 0.0
    %133 = vmatpush.msra.mxu0 0.0
    %134 = vmatpush.msra.mxu0 0.0
    %135 = vmatpush.msra.mxu0 0.0
    %136 = vmatpush.msra.mxu0 0.0
    %137 = vmatpush.msra.mxu0 0.0
    %138 = vmatpush.msra.mxu0 0.0
    %139 = vmatpush.msra.mxu0 0.0
    %140 = vmatpush.msra.mxu0 0.0
    %141 = vmatpush.msra.mxu0 0.0
    %142 = vmatpush.msra.mxu0 0.0
    %v143 = vand.u32 %v46, 4294901760
    %144 = vmatpush.msra.mxu0 %v143
    %v145 = vand.u32 %v50, 4294901760
    %v146 = vsub.f32 %v50, %v145
    %v147 = vand.u32 %v146, 4294901760
    %148 = vmatmul.f32.gmra.mxu0 %v147
    %v149 = vpop.f32.mrf.mxu0
    %v150 = vadd.f32 %v126, %v149
    %151 = vdwg.mxu0
    %152 = vmatpush.msra.mxu0 0.0
    %153 = vmatpush.msra.mxu0 0.0
    %154 = vmatpush.msra.mxu0 0.0
    %155 = vmatpush.msra.mxu0 0.0
    %156 = vmatpush.msra.mxu0 0.0
    %157 = vmatpush.msra.mxu0 0.0
    %158 = vmatpush.msra.mxu0 0.0
    %159 = vmatpush.msra.mxu0 0.0
    %160 = vmatpush.msra.mxu0 0.0
    %161 = vmatpush.msra.mxu0 0.0
    %162 = vmatpush.msra.mxu0 0.0
    %163 = vmatpush.msra.mxu0 0.0
    %164 = vmatpush.msra.mxu0 0.0
    %165 = vmatpush.msra.mxu0 0.0
    %166 = vmatpush.msra.mxu0 0.0
    %v167 = vand.u32 %v46, 4294901760
    %v168 = vsub.f32 %v46, %v167
    %v169 = vand.u32 %v168, 4294901760
    %170 = vmatpush.msra.mxu0 %v169
    %v171 = vand.u32 %v50, 4294901760
    %172 = vmatmul.f32.gmra.mxu0 %v171
    %v173 = vpop.f32.mrf.mxu0
    %v174 = vadd.f32 %v150, %v173
    %175 = vdwg.mxu0
    %176 = vmatpush.msra.mxu0 0.0
    %177 = vmatpush.msra.mxu0 0.0
    %178 = vmatpush.msra.mxu0 0.0
    %179 = vmatpush.msra.mxu0 0.0
    %180 = vmatpush.msra.mxu0 0.0
    %181 = vmatpush.msra.mxu0 0.0
    %182 = vmatpush.msra.mxu0 0.0
    %183 = vmatpush.msra.mxu0 0.0
    %184 = vmatpush.msra.mxu0 0.0
    %185 = vmatpush.msra.mxu0 0.0
    %186 = vmatpush.msra.mxu0 0.0
    %187 = vmatpush.msra.mxu0 0.0
    %188 = vmatpush.msra.mxu0 0.0
    %189 = vmatpush.msra.mxu0 0.0
    %190 = vmatpush.msra.mxu0 0.0
    %v191 = vand.u32 %v46, 4294901760
    %192 = vmatpush.msra.mxu0 %v191
    %v193 = vand.u32 %v50, 4294901760
    %194 = vmatmul.f32.gmra.mxu0 %v193
    %v195 = vpop.f32.mrf.mxu0
    %v196 = vadd.f32 %v174, %v195
    %197 = vdwg.mxu0
    %v198 = vmax.f32 %v196, 0.0
    %v199 = vld [vmem:[#allocation4 + $0x8] sm:$0xff]
    %v200 = vld [vmem:[#allocation4 + $0x10] sm:$0xff]
    %v201 = vld [vmem:[#allocation4 + $0x18] sm:$0xff]
    %v202 = vld [vmem:[#allocation4 + $0x20] sm:$0xff]
    %v203 = vld [vmem:[#allocation4 + $0x49] sm:$0x1]
    %vm204 = vcmask 261120
    %v206 = vsel %vm204, %v198, 0
    %208 = vmatpush.msra.mxu0 0.0
    %209 = vmatpush.msra.mxu0 0.0
    %210 = vmatpush.msra.mxu0 0.0
    %211 = vmatpush.msra.mxu0 0.0
    %212 = vmatpush.msra.mxu0 0.0
    %213 = vmatpush.msra.mxu0 0.0
    %214 = vmatpush.msra.mxu0 0.0
    %215 = vmatpush.msra.mxu0 0.0
    %216 = vmatpush.msra.mxu0 0.0
    %217 = vmatpush.msra.mxu0 0.0
    %218 = vmatpush.msra.mxu0 0.0
    %219 = vmatpush.msra.mxu0 0.0
    %v220 = vand.u32 %v202, 4294901760
    %221 = vmatpush.msra.mxu0 %v220
    %v222 = vand.u32 %v201, 4294901760
    %223 = vmatpush.msra.mxu0 %v222
    %v224 = vand.u32 %v200, 4294901760
    %225 = vmatpush.msra.mxu0 %v224
    %v226 = vand.u32 %v199, 4294901760
    %227 = vmatpush.msra.mxu0 %v226
    %v228 = vand.u32 %v206, 4294901760
    %v229 = vsub.f32 %v206, %v228
    %v230 = vand.u32 %v229, 4294901760
    %v231 = vsub.f32 %v229, %v230
    %v232 = vand.u32 %v231, 4294901760
    %233 = vmatmul.f32.gmra.mxu0 %v232
    %v234 = vpop.f32.mrf.mxu0
    %v235 = vadd.f32 %v203, %v234
    %236 = vdwg.mxu0
    %237 = vmatpush.msra.mxu0 0.0
    %238 = vmatpush.msra.mxu0 0.0
    %239 = vmatpush.msra.mxu0 0.0
    %240 = vmatpush.msra.mxu0 0.0
    %241 = vmatpush.msra.mxu0 0.0
    %242 = vmatpush.msra.mxu0 0.0
    %243 = vmatpush.msra.mxu0 0.0
    %244 = vmatpush.msra.mxu0 0.0
    %245 = vmatpush.msra.mxu0 0.0
    %246 = vmatpush.msra.mxu0 0.0
    %247 = vmatpush.msra.mxu0 0.0
    %248 = vmatpush.msra.mxu0 0.0
    %v249 = vand.u32 %v202, 4294901760
    %v250 = vsub.f32 %v202, %v249
    %v251 = vand.u32 %v250, 4294901760
    %v252 = vsub.f32 %v250, %v251
    %v253 = vand.u32 %v252, 4294901760
    %254 = vmatpush.msra.mxu0 %v253
    %v255 = vand.u32 %v201, 4294901760
    %v256 = vsub.f32 %v201, %v255
    %v257 = vand.u32 %v256, 4294901760
    %v258 = vsub.f32 %v256, %v257
    %v259 = vand.u32 %v258, 4294901760
    %260 = vmatpush.msra.mxu0 %v259
    %v261 = vand.u32 %v200, 4294901760
    %v262 = vsub.f32 %v200, %v261
    %v263 = vand.u32 %v262, 4294901760
    %v264 = vsub.f32 %v262, %v263
    %v265 = vand.u32 %v264, 4294901760
    %266 = vmatpush.msra.mxu0 %v265
    %v267 = vand.u32 %v199, 4294901760
    %v268 = vsub.f32 %v199, %v267
    %v269 = vand.u32 %v268, 4294901760
    %v270 = vsub.f32 %v268, %v269
    %v271 = vand.u32 %v270, 4294901760
    %272 = vmatpush.msra.mxu0 %v271
    %v273 = vand.u32 %v206, 4294901760
    %274 = vmatmul.f32.gmra.mxu0 %v273
    %v275 = vpop.f32.mrf.mxu0
    %v276 = vadd.f32 %v235, %v275
    %277 = vdwg.mxu0
    %278 = vmatpush.msra.mxu0 0.0
    %279 = vmatpush.msra.mxu0 0.0
    %280 = vmatpush.msra.mxu0 0.0
    %281 = vmatpush.msra.mxu0 0.0
    %282 = vmatpush.msra.mxu0 0.0
    %283 = vmatpush.msra.mxu0 0.0
    %284 = vmatpush.msra.mxu0 0.0
    %285 = vmatpush.msra.mxu0 0.0
    %286 = vmatpush.msra.mxu0 0.0
    %287 = vmatpush.msra.mxu0 0.0
    %288 = vmatpush.msra.mxu0 0.0
    %289 = vmatpush.msra.mxu0 0.0
    %v290 = vand.u32 %v202, 4294901760
    %v291 = vsub.f32 %v202, %v290
    %292 = vmatpush.msra.mxu0 %v291
    %v293 = vand.u32 %v201, 4294901760
    %v294 = vsub.f32 %v201, %v293
    %295 = vmatpush.msra.mxu0 %v294
    %v296 = vand.u32 %v200, 4294901760
    %v297 = vsub.f32 %v200, %v296
    %298 = vmatpush.msra.mxu0 %v297
    %v299 = vand.u32 %v199, 4294901760
    %v300 = vsub.f32 %v199, %v299
    %301 = vmatpush.msra.mxu0 %v300
    %v302 = vand.u32 %v206, 4294901760
    %v303 = vsub.f32 %v206, %v302
    %304 = vmatmul.f32.gmra.mxu0 %v303
    %v305 = vpop.f32.mrf.mxu0
    %v306 = vadd.f32 %v276, %v305
    %307 = vdwg.mxu0
    %308 = vmatpush.msra.mxu0 0.0
    %309 = vmatpush.msra.mxu0 0.0
    %310 = vmatpush.msra.mxu0 0.0
    %311 = vmatpush.msra.mxu0 0.0
    %312 = vmatpush.msra.mxu0 0.0
    %313 = vmatpush.msra.mxu0 0.0
    %314 = vmatpush.msra.mxu0 0.0
    %315 = vmatpush.msra.mxu0 0.0
    %316 = vmatpush.msra.mxu0 0.0
    %317 = vmatpush.msra.mxu0 0.0
    %318 = vmatpush.msra.mxu0 0.0
    %319 = vmatpush.msra.mxu0 0.0
    %v320 = vand.u32 %v202, 4294901760
    %321 = vmatpush.msra.mxu0 %v320
    %v322 = vand.u32 %v201, 4294901760
    %323 = vmatpush.msra.mxu0 %v322
    %v324 = vand.u32 %v200, 4294901760
    %325 = vmatpush.msra.mxu0 %v324
    %v326 = vand.u32 %v199, 4294901760
    %327 = vmatpush.msra.mxu0 %v326
    %v328 = vand.u32 %v206, 4294901760
    %v329 = vsub.f32 %v206, %v328
    %v330 = vand.u32 %v329, 4294901760
    %331 = vmatmul.f32.gmra.mxu0 %v330
    %v332 = vpop.f32.mrf.mxu0
    %v333 = vadd.f32 %v306, %v332
    %334 = vdwg.mxu0
    %335 = vmatpush.msra.mxu0 0.0
    %336 = vmatpush.msra.mxu0 0.0
    %337 = vmatpush.msra.mxu0 0.0
    %338 = vmatpush.msra.mxu0 0.0
    %339 = vmatpush.msra.mxu0 0.0
    %340 = vmatpush.msra.mxu0 0.0
    %341 = vmatpush.msra.mxu0 0.0
    %342 = vmatpush.msra.mxu0 0.0
    %343 = vmatpush.msra.mxu0 0.0
    %344 = vmatpush.msra.mxu0 0.0
    %345 = vmatpush.msra.mxu0 0.0
    %346 = vmatpush.msra.mxu0 0.0
    %v347 = vand.u32 %v202, 4294901760
    %v348 = vsub.f32 %v202, %v347
    %v349 = vand.u32 %v348, 4294901760
    %350 = vmatpush.msra.mxu0 %v349
    %v351 = vand.u32 %v201, 4294901760
    %v352 = vsub.f32 %v201, %v351
    %v353 = vand.u32 %v352, 4294901760
    %354 = vmatpush.msra.mxu0 %v353
    %v355 = vand.u32 %v200, 4294901760
    %v356 = vsub.f32 %v200, %v355
    %v357 = vand.u32 %v356, 4294901760
    %358 = vmatpush.msra.mxu0 %v357
    %v359 = vand.u32 %v199, 4294901760
    %v360 = vsub.f32 %v199, %v359
    %v361 = vand.u32 %v360, 4294901760
    %362 = vmatpush.msra.mxu0 %v361
    %v363 = vand.u32 %v206, 4294901760
    %364 = vmatmul.f32.gmra.mxu0 %v363
    %v365 = vpop.f32.mrf.mxu0
    %v366 = vadd.f32 %v333, %v365
    %367 = vdwg.mxu0
    %368 = vmatpush.msra.mxu0 0.0
    %369 = vmatpush.msra.mxu0 0.0
    %370 = vmatpush.msra.mxu0 0.0
    %371 = vmatpush.msra.mxu0 0.0
    %372 = vmatpush.msra.mxu0 0.0
    %373 = vmatpush.msra.mxu0 0.0
    %374 = vmatpush.msra.mxu0 0.0
    %375 = vmatpush.msra.mxu0 0.0
    %376 = vmatpush.msra.mxu0 0.0
    %377 = vmatpush.msra.mxu0 0.0
    %378 = vmatpush.msra.mxu0 0.0
    %379 = vmatpush.msra.mxu0 0.0
    %v380 = vand.u32 %v202, 4294901760
    %381 = vmatpush.msra.mxu0 %v380
    %v382 = vand.u32 %v201, 4294901760
    %383 = vmatpush.msra.mxu0 %v382
    %v384 = vand.u32 %v200, 4294901760
    %385 = vmatpush.msra.mxu0 %v384
    %v386 = vand.u32 %v199, 4294901760
    %387 = vmatpush.msra.mxu0 %v386
    %v388 = vand.u32 %v206, 4294901760
    %389 = vmatmul.f32.gmra.mxu0 %v388
    %v390 = vpop.f32.mrf.mxu0
    %v391 = vadd.f32 %v366, %v390
    %392 = vdwg.mxu0
    %v393 = vmax.f32 %v391, 0.0
    %v394 = vld [vmem:[#allocation4 + $0x28] sm:$0xff]
    %v395 = vld [vmem:[#allocation4 + $0x30] sm:$0xff]
    %v396 = vld [vmem:[#allocation4 + $0x4a] sm:$0x1]
    %v397 = vperm.slane %v396, 0
    %vm398 = vcmask 130048
    %v400 = vsel %vm398, %v45, 0
    %402 = vmatpush.msra.mxu0 0.0
    %403 = vmatpush.msra.mxu0 0.0
    %404 = vmatpush.msra.mxu0 0.0
    %405 = vmatpush.msra.mxu0 0.0
    %406 = vmatpush.msra.mxu0 0.0
    %407 = vmatpush.msra.mxu0 0.0
    %408 = vmatpush.msra.mxu0 0.0
    %409 = vmatpush.msra.mxu0 0.0
    %410 = vmatpush.msra.mxu0 0.0
    %411 = vmatpush.msra.mxu0 0.0
    %412 = vmatpush.msra.mxu0 0.0
    %413 = vmatpush.msra.mxu0 0.0
    %414 = vmatpush.msra.mxu0 0.0
    %415 = vmatpush.msra.mxu0 0.0
    %v416 = vand.u32 %v395, 4294901760
    %417 = vmatpush.msra.mxu0 %v416
    %v418 = vand.u32 %v394, 4294901760
    %419 = vmatpush.msra.mxu0 %v418
    %v420 = vand.u32 %v400, 4294901760
    %v421 = vsub.f32 %v400, %v420
    %v422 = vand.u32 %v421, 4294901760
    %v423 = vsub.f32 %v421, %v422
    %v424 = vand.u32 %v423, 4294901760
    %425 = vmatmul.f32.gmra.mxu0 %v424
    %v426 = vpop.f32.mrf.mxu0
    %v427 = vadd.f32 %v397, %v426
    %428 = vdwg.mxu0
    %429 = vmatpush.msra.mxu0 0.0
    %430 = vmatpush.msra.mxu0 0.0
    %431 = vmatpush.msra.mxu0 0.0
    %432 = vmatpush.msra.mxu0 0.0
    %433 = vmatpush.msra.mxu0 0.0
    %434 = vmatpush.msra.mxu0 0.0
    %435 = vmatpush.msra.mxu0 0.0
    %436 = vmatpush.msra.mxu0 0.0
    %437 = vmatpush.msra.mxu0 0.0
    %438 = vmatpush.msra.mxu0 0.0
    %439 = vmatpush.msra.mxu0 0.0
    %440 = vmatpush.msra.mxu0 0.0
    %441 = vmatpush.msra.mxu0 0.0
    %442 = vmatpush.msra.mxu0 0.0
    %v443 = vand.u32 %v395, 4294901760
    %v444 = vsub.f32 %v395, %v443
    %v445 = vand.u32 %v444, 4294901760
    %v446 = vsub.f32 %v444, %v445
    %v447 = vand.u32 %v446, 4294901760
    %448 = vmatpush.msra.mxu0 %v447
    %v449 = vand.u32 %v394, 4294901760
    %v450 = vsub.f32 %v394, %v449
    %v451 = vand.u32 %v450, 4294901760
    %v452 = vsub.f32 %v450, %v451
    %v453 = vand.u32 %v452, 4294901760
    %454 = vmatpush.msra.mxu0 %v453
    %v455 = vand.u32 %v400, 4294901760
    %456 = vmatmul.f32.gmra.mxu0 %v455
    %v457 = vpop.f32.mrf.mxu0
    %v458 = vadd.f32 %v427, %v457
    %459 = vdwg.mxu0
    %460 = vmatpush.msra.mxu0 0.0
    %461 = vmatpush.msra.mxu0 0.0
    %462 = vmatpush.msra.mxu0 0.0
    %463 = vmatpush.msra.mxu0 0.0
    %464 = vmatpush.msra.mxu0 0.0
    %465 = vmatpush.msra.mxu0 0.0
    %466 = vmatpush.msra.mxu0 0.0
    %467 = vmatpush.msra.mxu0 0.0
    %468 = vmatpush.msra.mxu0 0.0
    %469 = vmatpush.msra.mxu0 0.0
    %470 = vmatpush.msra.mxu0 0.0
    %471 = vmatpush.msra.mxu0 0.0
    %472 = vmatpush.msra.mxu0 0.0
    %473 = vmatpush.msra.mxu0 0.0
    %v474 = vand.u32 %v395, 4294901760
    %v475 = vsub.f32 %v395, %v474
    %476 = vmatpush.msra.mxu0 %v475
    %v477 = vand.u32 %v394, 4294901760
    %v478 = vsub.f32 %v394, %v477
    %479 = vmatpush.msra.mxu0 %v478
    %v480 = vand.u32 %v400, 4294901760
    %v481 = vsub.f32 %v400, %v480
    %482 = vmatmul.f32.gmra.mxu0 %v481
    %v483 = vpop.f32.mrf.mxu0
    %v484 = vadd.f32 %v458, %v483
    %485 = vdwg.mxu0
    %486 = vmatpush.msra.mxu0 0.0
    %487 = vmatpush.msra.mxu0 0.0
    %488 = vmatpush.msra.mxu0 0.0
    %489 = vmatpush.msra.mxu0 0.0
    %490 = vmatpush.msra.mxu0 0.0
    %491 = vmatpush.msra.mxu0 0.0
    %492 = vmatpush.msra.mxu0 0.0
    %493 = vmatpush.msra.mxu0 0.0
    %494 = vmatpush.msra.mxu0 0.0
    %495 = vmatpush.msra.mxu0 0.0
    %496 = vmatpush.msra.mxu0 0.0
    %497 = vmatpush.msra.mxu0 0.0
    %498 = vmatpush.msra.mxu0 0.0
    %499 = vmatpush.msra.mxu0 0.0
    %v500 = vand.u32 %v395, 4294901760
    %501 = vmatpush.msra.mxu0 %v500
    %v502 = vand.u32 %v394, 4294901760
    %503 = vmatpush.msra.mxu0 %v502
    %v504 = vand.u32 %v400, 4294901760
    %v505 = vsub.f32 %v400, %v504
    %v506 = vand.u32 %v505, 4294901760
    %507 = vmatmul.f32.gmra.mxu0 %v506
    %v508 = vpop.f32.mrf.mxu0
    %v509 = vadd.f32 %v484, %v508
    %510 = vdwg.mxu0
    %511 = vmatpush.msra.mxu0 0.0
    %512 = vmatpush.msra.mxu0 0.0
    %513 = vmatpush.msra.mxu0 0.0
    %514 = vmatpush.msra.mxu0 0.0
    %515 = vmatpush.msra.mxu0 0.0
    %516 = vmatpush.msra.mxu0 0.0
    %517 = vmatpush.msra.mxu0 0.0
    %518 = vmatpush.msra.mxu0 0.0
    %519 = vmatpush.msra.mxu0 0.0
    %520 = vmatpush.msra.mxu0 0.0
    %521 = vmatpush.msra.mxu0 0.0
    %522 = vmatpush.msra.mxu0 0.0
    %523 = vmatpush.msra.mxu0 0.0
    %524 = vmatpush.msra.mxu0 0.0
    %v525 = vand.u32 %v395, 4294901760
    %v526 = vsub.f32 %v395, %v525
    %v527 = vand.u32 %v526, 4294901760
    %528 = vmatpush.msra.mxu0 %v527
    %v529 = vand.u32 %v394, 4294901760
    %v530 = vsub.f32 %v394, %v529
    %v531 = vand.u32 %v530, 4294901760
    %532 = vmatpush.msra.mxu0 %v531
    %v533 = vand.u32 %v400, 4294901760
    %534 = vmatmul.f32.gmra.mxu0 %v533
    %v535 = vpop.f32.mrf.mxu0
    %v536 = vadd.f32 %v509, %v535
    %537 = vdwg.mxu0
    %538 = vmatpush.msra.mxu0 0.0
    %539 = vmatpush.msra.mxu0 0.0
    %540 = vmatpush.msra.mxu0 0.0
    %541 = vmatpush.msra.mxu0 0.0
    %542 = vmatpush.msra.mxu0 0.0
    %543 = vmatpush.msra.mxu0 0.0
    %544 = vmatpush.msra.mxu0 0.0
    %545 = vmatpush.msra.mxu0 0.0
    %546 = vmatpush.msra.mxu0 0.0
    %547 = vmatpush.msra.mxu0 0.0
    %548 = vmatpush.msra.mxu0 0.0
    %549 = vmatpush.msra.mxu0 0.0
    %550 = vmatpush.msra.mxu0 0.0
    %551 = vmatpush.msra.mxu0 0.0
    %v552 = vand.u32 %v395, 4294901760
    %553 = vmatpush.msra.mxu0 %v552
    %v554 = vand.u32 %v394, 4294901760
    %555 = vmatpush.msra.mxu0 %v554
    %v556 = vand.u32 %v400, 4294901760
    %557 = vmatmul.f32.gmra.mxu0 %v556
    %v558 = vpop.f32.mrf.mxu0
    %v559 = vadd.f32 %v536, %v558
    %560 = vdwg.mxu0
    %v561 = vmax.f32 %v559, 0.0
    %vm562 = vcmask 523520
    %v563 = vsel %vm562, %v559, 0.0
    %v564 = vrot.slane %v563, 4
    %v565 = vadd.f32 %v563, %v564
    %v566 = vrot.slane %v565, 2
    %v567 = vadd.f32 %v565, %v566
    %v568 = vrot.slane %v567, 1
    %v569 = vadd.f32 %v567, %v568
    %v570 = vmul.f32 %v569, 0.125
    %v571 = vadd.f32 %v196, %v570
    %v572 = vmax.f32 %v571, 0.0
    %v574 = vrot.slane %v572, 7
    %575 = vrot.lane.b32.xlu0 %v574, 96
    %v576 = vpop.permute.xlu0 %575
    %vm578 = vcmask 1040384
    %v579 = vsel %vm578, %v393, %v576
    %vm580 = vcmask 1041408
    %v581 = vsel %vm580, %v579, 0.0
    %v582 = vld [vmem:[#allocation4 + $0x38] sm:$0xff]
    %v583 = vld [vmem:[#allocation4 + $0x40] sm:$0xff]
    %v585 = vsel %vm204, %v582, 0
    %v588 = vsel %vm204, %v561, 0
    %v591 = vsel %vm204, %v581, 0
    %v594 = vsel %vm204, 0.0, 0
    %v596 = vand.u32 %v594, 4294901760
    %597 = vmatpush.xpose.msra.mxu0 %v596
    %v598 = vand.u32 %v594, 4294901760
    %599 = vmatpush.xpose.msra.mxu0 %v598
    %v600 = vand.u32 %v594, 4294901760
    %601 = vmatpush.xpose.msra.mxu0 %v600
    %v602 = vand.u32 %v594, 4294901760
    %603 = vmatpush.xpose.msra.mxu0 %v602
    %v604 = vand.u32 %v594, 4294901760
    %605 = vmatpush.xpose.msra.mxu0 %v604
    %v606 = vand.u32 %v594, 4294901760
    %607 = vmatpush.xpose.msra.mxu0 %v606
    %v608 = vand.u32 %v594, 4294901760
    %609 = vmatpush.xpose.msra.mxu0 %v608
    %v610 = vand.u32 %v594, 4294901760
    %611 = vmatpush.xpose.msra.mxu0 %v610
    %v612 = vand.u32 %v594, 4294901760
    %613 = vmatpush.xpose.msra.mxu0 %v612
    %v614 = vand.u32 %v594, 4294901760
    %615 = vmatpush.xpose.msra.mxu0 %v614
    %v616 = vand.u32 %v594, 4294901760
    %617 = vmatpush.xpose.msra.mxu0 %v616
    %v618 = vand.u32 %v594, 4294901760
    %619 = vmatpush.xpose.msra.mxu0 %v618
    %v620 = vand.u32 %v594, 4294901760
    %621 = vmatpush.xpose.msra.mxu0 %v620
    %v622 = vand.u32 %v594, 4294901760
    %623 = vmatpush.xpose.msra.mxu0 %v622
    %v624 = vand.u32 %v591, 4294901760
    %625 = vmatpush.xpose.msra.mxu0 %v624
    %v626 = vand.u32 %v588, 4294901760
    %627 = vmatpush.xpose.msra.mxu0 %v626
    %v628 = vand.u32 %v585, 4294901760
    %v629 = vsub.f32 %v585, %v628
    %v630 = vand.u32 %v629, 4294901760
    %v631 = vsub.f32 %v629, %v630
    %v632 = vand.u32 %v631, 4294901760
    %633 = vmatmul.f32.gmra.mxu0 %v632
    %v634 = vpop.f32.mrf.mxu0
    %v635 = vadd.f32 %v583, %v634
    %636 = vdwg.mxu0
    %v637 = vand.u32 %v594, 4294901760
    %v638 = vsub.f32 %v594, %v637
    %v639 = vand.u32 %v638, 4294901760
    %v640 = vsub.f32 %v638, %v639
    %v641 = vand.u32 %v640, 4294901760
    %642 = vmatpush.xpose.msra.mxu0 %v641
    %v643 = vand.u32 %v594, 4294901760
    %v644 = vsub.f32 %v594, %v643
    %v645 = vand.u32 %v644, 4294901760
    %v646 = vsub.f32 %v644, %v645
    %v647 = vand.u32 %v646, 4294901760
    %648 = vmatpush.xpose.msra.mxu0 %v647
    %v649 = vand.u32 %v594, 4294901760
    %v650 = vsub.f32 %v594, %v649
    %v651 = vand.u32 %v650, 4294901760
    %v652 = vsub.f32 %v650, %v651
    %v653 = vand.u32 %v652, 4294901760
    %654 = vmatpush.xpose.msra.mxu0 %v653
    %v655 = vand.u32 %v594, 4294901760
    %v656 = vsub.f32 %v594, %v655
    %v657 = vand.u32 %v656, 4294901760
    %v658 = vsub.f32 %v656, %v657
    %v659 = vand.u32 %v658, 4294901760
    %660 = vmatpush.xpose.msra.mxu0 %v659
    %v661 = vand.u32 %v594, 4294901760
    %v662 = vsub.f32 %v594, %v661
    %v663 = vand.u32 %v662, 4294901760
    %v664 = vsub.f32 %v662, %v663
    %v665 = vand.u32 %v664, 4294901760
    %666 = vmatpush.xpose.msra.mxu0 %v665
    %v667 = vand.u32 %v594, 4294901760
    %v668 = vsub.f32 %v594, %v667
    %v669 = vand.u32 %v668, 4294901760
    %v670 = vsub.f32 %v668, %v669
    %v671 = vand.u32 %v670, 4294901760
    %672 = vmatpush.xpose.msra.mxu0 %v671
    %v673 = vand.u32 %v594, 4294901760
    %v674 = vsub.f32 %v594, %v673
    %v675 = vand.u32 %v674, 4294901760
    %v676 = vsub.f32 %v674, %v675
    %v677 = vand.u32 %v676, 4294901760
    %678 = vmatpush.xpose.msra.mxu0 %v677
    %v679 = vand.u32 %v594, 4294901760
    %v680 = vsub.f32 %v594, %v679
    %v681 = vand.u32 %v680, 4294901760
    %v682 = vsub.f32 %v680, %v681
    %v683 = vand.u32 %v682, 4294901760
    %684 = vmatpush.xpose.msra.mxu0 %v683
    %v685 = vand.u32 %v594, 4294901760
    %v686 = vsub.f32 %v594, %v685
    %v687 = vand.u32 %v686, 4294901760
    %v688 = vsub.f32 %v686, %v687
    %v689 = vand.u32 %v688, 4294901760
    %690 = vmatpush.xpose.msra.mxu0 %v689
    %v691 = vand.u32 %v594, 4294901760
    %v692 = vsub.f32 %v594, %v691
    %v693 = vand.u32 %v692, 4294901760
    %v694 = vsub.f32 %v692, %v693
    %v695 = vand.u32 %v694, 4294901760
    %696 = vmatpush.xpose.msra.mxu0 %v695
    %v697 = vand.u32 %v594, 4294901760
    %v698 = vsub.f32 %v594, %v697
    %v699 = vand.u32 %v698, 4294901760
    %v700 = vsub.f32 %v698, %v699
    %v701 = vand.u32 %v700, 4294901760
    %702 = vmatpush.xpose.msra.mxu0 %v701
    %v703 = vand.u32 %v594, 4294901760
    %v704 = vsub.f32 %v594, %v703
    %v705 = vand.u32 %v704, 4294901760
    %v706 = vsub.f32 %v704, %v705
    %v707 = vand.u32 %v706, 4294901760
    %708 = vmatpush.xpose.msra.mxu0 %v707
    %v709 = vand.u32 %v594, 4294901760
    %v710 = vsub.f32 %v594, %v709
    %v711 = vand.u32 %v710, 4294901760
    %v712 = vsub.f32 %v710, %v711
    %v713 = vand.u32 %v712, 4294901760
    %714 = vmatpush.xpose.msra.mxu0 %v713
    %v715 = vand.u32 %v594, 4294901760
    %v716 = vsub.f32 %v594, %v715
    %v717 = vand.u32 %v716, 4294901760
    %v718 = vsub.f32 %v716, %v717
    %v719 = vand.u32 %v718, 4294901760
    %720 = vmatpush.xpose.msra.mxu0 %v719
    %v721 = vand.u32 %v591, 4294901760
    %v722 = vsub.f32 %v591, %v721
    %v723 = vand.u32 %v722, 4294901760
    %v724 = vsub.f32 %v722, %v723
    %v725 = vand.u32 %v724, 4294901760
    %726 = vmatpush.xpose.msra.mxu0 %v725
    %v727 = vand.u32 %v588, 4294901760
    %v728 = vsub.f32 %v588, %v727
    %v729 = vand.u32 %v728, 4294901760
    %v730 = vsub.f32 %v728, %v729
    %v731 = vand.u32 %v730, 4294901760
    %732 = vmatpush.xpose.msra.mxu0 %v731
    %v733 = vand.u32 %v585, 4294901760
    %734 = vmatmul.f32.gmra.mxu0 %v733
    %v735 = vpop.f32.mrf.mxu0
    %v736 = vadd.f32 %v635, %v735
    %737 = vdwg.mxu0
    %v738 = vand.u32 %v594, 4294901760
    %v739 = vsub.f32 %v594, %v738
    %740 = vmatpush.xpose.msra.mxu0 %v739
    %v741 = vand.u32 %v594, 4294901760
    %v742 = vsub.f32 %v594, %v741
    %743 = vmatpush.xpose.msra.mxu0 %v742
    %v744 = vand.u32 %v594, 4294901760
    %v745 = vsub.f32 %v594, %v744
    %746 = vmatpush.xpose.msra.mxu0 %v745
    %v747 = vand.u32 %v594, 4294901760
    %v748 = vsub.f32 %v594, %v747
    %749 = vmatpush.xpose.msra.mxu0 %v748
    %v750 = vand.u32 %v594, 4294901760
    %v751 = vsub.f32 %v594, %v750
    %752 = vmatpush.xpose.msra.mxu0 %v751
    %v753 = vand.u32 %v594, 4294901760
    %v754 = vsub.f32 %v594, %v753
    %755 = vmatpush.xpose.msra.mxu0 %v754
    %v756 = vand.u32 %v594, 4294901760
    %v757 = vsub.f32 %v594, %v756
    %758 = vmatpush.xpose.msra.mxu0 %v757
    %v759 = vand.u32 %v594, 4294901760
    %v760 = vsub.f32 %v594, %v759
    %761 = vmatpush.xpose.msra.mxu0 %v760
    %v762 = vand.u32 %v594, 4294901760
    %v763 = vsub.f32 %v594, %v762
    %764 = vmatpush.xpose.msra.mxu0 %v763
    %v765 = vand.u32 %v594, 4294901760
    %v766 = vsub.f32 %v594, %v765
    %767 = vmatpush.xpose.msra.mxu0 %v766
    %v768 = vand.u32 %v594, 4294901760
    %v769 = vsub.f32 %v594, %v768
    %770 = vmatpush.xpose.msra.mxu0 %v769
    %v771 = vand.u32 %v594, 4294901760
    %v772 = vsub.f32 %v594, %v771
    %773 = vmatpush.xpose.msra.mxu0 %v772
    %v774 = vand.u32 %v594, 4294901760
    %v775 = vsub.f32 %v594, %v774
    %776 = vmatpush.xpose.msra.mxu0 %v775
    %v777 = vand.u32 %v594, 4294901760
    %v778 = vsub.f32 %v594, %v777
    %779 = vmatpush.xpose.msra.mxu0 %v778
    %v780 = vand.u32 %v591, 4294901760
    %v781 = vsub.f32 %v591, %v780
    %782 = vmatpush.xpose.msra.mxu0 %v781
    %v783 = vand.u32 %v588, 4294901760
    %v784 = vsub.f32 %v588, %v783
    %785 = vmatpush.xpose.msra.mxu0 %v784
    %v786 = vand.u32 %v585, 4294901760
    %v787 = vsub.f32 %v585, %v786
    %788 = vmatmul.f32.gmra.mxu0 %v787
    %v789 = vpop.f32.mrf.mxu0
    %v790 = vadd.f32 %v736, %v789
    %791 = vdwg.mxu0
    %v792 = vand.u32 %v594, 4294901760
    %793 = vmatpush.xpose.msra.mxu0 %v792
    %v794 = vand.u32 %v594, 4294901760
    %795 = vmatpush.xpose.msra.mxu0 %v794
    %v796 = vand.u32 %v594, 4294901760
    %797 = vmatpush.xpose.msra.mxu0 %v796
    %v798 = vand.u32 %v594, 4294901760
    %799 = vmatpush.xpose.msra.mxu0 %v798
    %v800 = vand.u32 %v594, 4294901760
    %801 = vmatpush.xpose.msra.mxu0 %v800
    %v802 = vand.u32 %v594, 4294901760
    %803 = vmatpush.xpose.msra.mxu0 %v802
    %v804 = vand.u32 %v594, 4294901760
    %805 = vmatpush.xpose.msra.mxu0 %v804
    %v806 = vand.u32 %v594, 4294901760
    %807 = vmatpush.xpose.msra.mxu0 %v806
    %v808 = vand.u32 %v594, 4294901760
    %809 = vmatpush.xpose.msra.mxu0 %v808
    %v810 = vand.u32 %v594, 4294901760
    %811 = vmatpush.xpose.msra.mxu0 %v810
    %v812 = vand.u32 %v594, 4294901760
    %813 = vmatpush.xpose.msra.mxu0 %v812
    %v814 = vand.u32 %v594, 4294901760
    %815 = vmatpush.xpose.msra.mxu0 %v814
    %v816 = vand.u32 %v594, 4294901760
    %817 = vmatpush.xpose.msra.mxu0 %v816
    %v818 = vand.u32 %v594, 4294901760
    %819 = vmatpush.xpose.msra.mxu0 %v818
    %v820 = vand.u32 %v591, 4294901760
    %821 = vmatpush.xpose.msra.mxu0 %v820
    %v822 = vand.u32 %v588, 4294901760
    %823 = vmatpush.xpose.msra.mxu0 %v822
    %v824 = vand.u32 %v585, 4294901760
    %v825 = vsub.f32 %v585, %v824
    %v826 = vand.u32 %v825, 4294901760
    %827 = vmatmul.f32.gmra.mxu0 %v826
    %v828 = vpop.f32.mrf.mxu0
    %v829 = vadd.f32 %v790, %v828
    %830 = vdwg.mxu0
    %v831 = vand.u32 %v594, 4294901760
    %v832 = vsub.f32 %v594, %v831
    %v833 = vand.u32 %v832, 4294901760
    %834 = vmatpush.xpose.msra.mxu0 %v833
    %v835 = vand.u32 %v594, 4294901760
    %v836 = vsub.f32 %v594, %v835
    %v837 = vand.u32 %v836, 4294901760
    %838 = vmatpush.xpose.msra.mxu0 %v837
    %v839 = vand.u32 %v594, 4294901760
    %v840 = vsub.f32 %v594, %v839
    %v841 = vand.u32 %v840, 4294901760
    %842 = vmatpush.xpose.msra.mxu0 %v841
    %v843 = vand.u32 %v594, 4294901760
    %v844 = vsub.f32 %v594, %v843
    %v845 = vand.u32 %v844, 4294901760
    %846 = vmatpush.xpose.msra.mxu0 %v845
    %v847 = vand.u32 %v594, 4294901760
    %v848 = vsub.f32 %v594, %v847
    %v849 = vand.u32 %v848, 4294901760
    %850 = vmatpush.xpose.msra.mxu0 %v849
    %v851 = vand.u32 %v594, 4294901760
    %v852 = vsub.f32 %v594, %v851
    %v853 = vand.u32 %v852, 4294901760
    %854 = vmatpush.xpose.msra.mxu0 %v853
    %v855 = vand.u32 %v594, 4294901760
    %v856 = vsub.f32 %v594, %v855
    %v857 = vand.u32 %v856, 4294901760
    %858 = vmatpush.xpose.msra.mxu0 %v857
    %v859 = vand.u32 %v594, 4294901760
    %v860 = vsub.f32 %v594, %v859
    %v861 = vand.u32 %v860, 4294901760
    %862 = vmatpush.xpose.msra.mxu0 %v861
    %v863 = vand.u32 %v594, 4294901760
    %v864 = vsub.f32 %v594, %v863
    %v865 = vand.u32 %v864, 4294901760
    %866 = vmatpush.xpose.msra.mxu0 %v865
    %v867 = vand.u32 %v594, 4294901760
    %v868 = vsub.f32 %v594, %v867
    %v869 = vand.u32 %v868, 4294901760
    %870 = vmatpush.xpose.msra.mxu0 %v869
    %v871 = vand.u32 %v594, 4294901760
    %v872 = vsub.f32 %v594, %v871
    %v873 = vand.u32 %v872, 4294901760
    %874 = vmatpush.xpose.msra.mxu0 %v873
    %v875 = vand.u32 %v594, 4294901760
    %v876 = vsub.f32 %v594, %v875
    %v877 = vand.u32 %v876, 4294901760
    %878 = vmatpush.xpose.msra.mxu0 %v877
    %v879 = vand.u32 %v594, 4294901760
    %v880 = vsub.f32 %v594, %v879
    %v881 = vand.u32 %v880, 4294901760
    %882 = vmatpush.xpose.msra.mxu0 %v881
    %v883 = vand.u32 %v594, 4294901760
    %v884 = vsub.f32 %v594, %v883
    %v885 = vand.u32 %v884, 4294901760
    %886 = vmatpush.xpose.msra.mxu0 %v885
    %v887 = vand.u32 %v591, 4294901760
    %v888 = vsub.f32 %v591, %v887
    %v889 = vand.u32 %v888, 4294901760
    %890 = vmatpush.xpose.msra.mxu0 %v889
    %v891 = vand.u32 %v588, 4294901760
    %v892 = vsub.f32 %v588, %v891
    %v893 = vand.u32 %v892, 4294901760
    %894 = vmatpush.xpose.msra.mxu0 %v893
    %v895 = vand.u32 %v585, 4294901760
    %896 = vmatmul.f32.gmra.mxu0 %v895
    %v897 = vpop.f32.mrf.mxu0
    %v898 = vadd.f32 %v829, %v897
    %899 = vdwg.mxu0
    %v900 = vand.u32 %v594, 4294901760
    %901 = vmatpush.xpose.msra.mxu0 %v900
    %v902 = vand.u32 %v594, 4294901760
    %903 = vmatpush.xpose.msra.mxu0 %v902
    %v904 = vand.u32 %v594, 4294901760
    %905 = vmatpush.xpose.msra.mxu0 %v904
    %v906 = vand.u32 %v594, 4294901760
    %907 = vmatpush.xpose.msra.mxu0 %v906
    %v908 = vand.u32 %v594, 4294901760
    %909 = vmatpush.xpose.msra.mxu0 %v908
    %v910 = vand.u32 %v594, 4294901760
    %911 = vmatpush.xpose.msra.mxu0 %v910
    %v912 = vand.u32 %v594, 4294901760
    %913 = vmatpush.xpose.msra.mxu0 %v912
    %v914 = vand.u32 %v594, 4294901760
    %915 = vmatpush.xpose.msra.mxu0 %v914
    %v916 = vand.u32 %v594, 4294901760
    %917 = vmatpush.xpose.msra.mxu0 %v916
    %v918 = vand.u32 %v594, 4294901760
    %919 = vmatpush.xpose.msra.mxu0 %v918
    %v920 = vand.u32 %v594, 4294901760
    %921 = vmatpush.xpose.msra.mxu0 %v920
    %v922 = vand.u32 %v594, 4294901760
    %923 = vmatpush.xpose.msra.mxu0 %v922
    %v924 = vand.u32 %v594, 4294901760
    %925 = vmatpush.xpose.msra.mxu0 %v924
    %v926 = vand.u32 %v594, 4294901760
    %927 = vmatpush.xpose.msra.mxu0 %v926
    %v928 = vand.u32 %v591, 4294901760
    %929 = vmatpush.xpose.msra.mxu0 %v928
    %v930 = vand.u32 %v588, 4294901760
    %931 = vmatpush.xpose.msra.mxu0 %v930
    %v932 = vand.u32 %v585, 4294901760
    %933 = vmatmul.f32.gmra.mxu0 %v932
    %v934 = vpop.f32.mrf.mxu0
    %v935 = vadd.f32 %v898, %v934
    %936 = vdwg.mxu0
    %v937 = vlaneseq
    %v938 = vshrl.u32 %v937, 7
    %v939 = vmax.f32 %v935, -1000.0
    %v940 = vmin.f32 %v939, 1000.0
    %v941 = vmax.f32 %v935, -10.0
    %v942 = vmin.f32 %v941, 2.0
    %v943 = vmul.f32 %v942, 1.442695
    %v944 = vpow.pop %v943
    %v945 = vmax.f32 %v944, 0.001
    %v946 = vmin.f32 %v945, 1.0
    %v947 = vadd.f32 %v946, 1e-06
    %vm948 = vcmp.eq.s32.totalorder %v938, 1
    %vm949 = vcmp.eq.s32.totalorder %v938, 2
    %v950 = vsel %vm949, %v947, %v935
    %v951 = vsel %vm948, %v940, %v950
    %952 = vst [vmem:[%s3] sm:$0xff] %v951
    // Predicated region
    $region22: #{actor_critic_forward_batched.1} parent=1 // pred_check
      _
    $region23: #{actor_critic_forward_batched.1} parent=1 // pred_check_branch
      %954 = sbr.rel (0) target = $region25
    $region24: #{actor_critic_forward_batched.1} parent=1 // pred_region
      _
    $region25: #{actor_critic_forward_batched.1} parent=1 // pred_fallthru
      _
    // Predicated region
    $region26: #{actor_critic_forward_batched.1} parent=1 // pred_check
      _
    $region27: #{actor_critic_forward_batched.1} parent=1 // pred_check_branch
      %956 = sbr.rel (0) target = $region29
    $region28: #{actor_critic_forward_batched.1} parent=1 // pred_region
      _
    $region29: #{actor_critic_forward_batched.1} parent=1 // pred_fallthru
      _
    %957 = vsyncpa [#allocation3], 1
    %958 = vsyncpa [#allocation5], 1

</llo_original>
